<compile_context>
chip_gen: v5e
topology: v5e:2x2
jax: 0.10.0
libtpu: 0.0.40
codegen_flags: <defaults>
</compile_context>

<pallas_src>
import functools

import jax
import jax.numpy as jnp
from jax.experimental import pallas as pl
from jax.experimental.pallas import tpu as pltpu

NEG_SLOPE = 0.2          # DGL GATConv default leaky-relu slope
_MASK_VAL = -1e30        # "minus infinity" for masked logits (finite, f32-safe)

NTYPES = ["author", "field_of_study", "institution", "paper"]
ETYPES = [  # (src_type, edge_name, dst_type)
    ("author", "writes", "paper"),
    ("paper", "cites", "paper"),
    ("field_of_study", "topic_of", "paper"),
    ("institution", "affiliated", "author"),
    ("paper", "has_topic", "field_of_study"),
    ("author", "affiliated_with", "institution"),
]


# --------------------- generation-aware tiling / VMEM budget -------------------
def _tpu_vmem_bytes():
    try:
        return int(pltpu.get_tpu_info().vmem_capacity_bytes)
    except Exception:
        return 64 * 1024 * 1024          # conservative: v7x has 64 MiB per TC

_VMEM_CAP = _tpu_vmem_bytes()
_VMEM_LIMIT = min(int(_VMEM_CAP * 0.6), 100 * 1024 * 1024)
if _VMEM_CAP >= 100 * 1024 * 1024:       # v5e / v6e: 128 MiB physical VMEM
    _ROW_TILE, _SRC_TILE = 512, 2048
else:                                    # v7x (or unknown / emulated)
    _ROW_TILE, _SRC_TILE = 256, 1024


def _tile(n, t):
    return n if n <= t else t


def _da_row_tile(n, d):
    # Keep ~4 live f32 [tn, d, d] intermediates within ~1/4 of the VMEM budget.
    budget = _VMEM_LIMIT // 4
    tn = min(_ROW_TILE, max(8, budget // max(1, 4 * d * d * 4)))
    tn = max(8, (tn // 8) * 8)
    return n if n <= tn else tn


# ---------------------- GATConv: source projection kernel ----------------------
def _gat_proj_kernel(f_ref, wc_ref, hsrc_ref, elt_ref, *, hid):
    # Single fused matmul: WC = [W | WL]  ->  [TNs, hid + H]
    h_all = jnp.dot(f_ref[...], wc_ref[...], preferred_element_type=jnp.float32)
    hsrc_ref[...] = h_all[:, :hid]            # per-source projected features
    elt_ref[...] = h_all[:, hid:].T            # fused attn_l logits, [H, TNs]


def gat_project(feat_src, wc, *, hid, n_heads):
    ns, fin = feat_src.shape
    tns = _tile(ns, _ROW_TILE)
    kernel = functools.partial(_gat_proj_kernel, hid=hid)
    return pl.pallas_call(
        kernel,
        out_shape=(jax.ShapeDtypeStruct((ns, hid), jnp.float32),
                   jax.ShapeDtypeStruct((n_heads, ns), jnp.float32)),
        grid=(pl.cdiv(ns, tns),),
        in_specs=[pl.BlockSpec((tns, fin), lambda i: (i, 0)),
                  pl.BlockSpec((fin, hid + n_heads), lambda i: (0, 0))],
        out_specs=(pl.BlockSpec((tns, hid), lambda i: (i, 0)),
                   pl.BlockSpec((n_heads, tns), lambda i: (0, i))),
        compiler_params=pltpu.CompilerParams(
            dimension_semantics=("parallel",),
            vmem_limit_bytes=_VMEM_LIMIT),
    )(feat_src, wc)


# ------------------ GATConv: attention + aggregation kernel --------------------
def _gat_attn_kernel(fd_ref, wr_ref, elt_ref, hsrc_ref, adj_ref, b_ref, accin_ref,
                     o_ref, m_ref, l_ref, acc_ref, *, n_heads, d_out):
    j = pl.program_id(1)                       # source-tile (reduction) axis

    @pl.when(j == 0)
    def _():
        m_ref[...] = jnp.full_like(m_ref, _MASK_VAL)
        l_ref[...] = jnp.zeros_like(l_ref)
        acc_ref[...] = jnp.zeros_like(acc_ref)

    # Fused attn_r projection; hdst itself is never materialized.  Tiny matmul,
    # recomputed per source tile (feat_dst block index is constant over j, so no
    # extra DMA).
    er = jnp.dot(fd_ref[...], wr_ref[...], preferred_element_type=jnp.float32)  # [TN, H]
    edge = adj_ref[...] != 0                  # int8 compare, computed once     # [TN, TS]

    for h in range(n_heads):
        e = er[:, h:h + 1] + elt_ref[h:h + 1, :]                                # [TN, TS]
        e = jnp.where(e > 0, e, NEG_SLOPE * e)                                  # leaky relu
        e = jnp.where(edge, e, _MASK_VAL)
        m_prev = m_ref[h]                                                        # [TN, 1]
        m_new = jnp.maximum(m_prev, jnp.max(e, axis=1, keepdims=True))
        # Zero-degree-safe: rows/tiles with no edges contribute exactly 0.
        p = jnp.where(edge, jnp.exp(e - m_new), 0.0)
        scale = jnp.exp(m_prev - m_new)
        l_ref[h] = scale * l_ref[h] + jnp.sum(p, axis=1, keepdims=True)
        acc_ref[h] = scale * acc_ref[h] + jnp.dot(
            p, hsrc_ref[:, h * d_out:(h + 1) * d_out],
            preferred_element_type=jnp.float32)
        m_ref[h] = m_new

    @pl.when(j == pl.num_programs(1) - 1)
    def _():
        heads = []
        for h in range(n_heads):
            inv = pl.reciprocal(jnp.maximum(l_ref[h], 1e-9), approx=True)
            heads.append(acc_ref[h] * inv)
        # single lane-dense store: running hetero-sum + this etype + bias
        o_ref[...] = accin_ref[...] + jnp.concatenate(heads, axis=1) + b_ref[...]


def gat_attention(feat_dst, adj, wr, elt, hsrc, bias, acc_in, *, n_heads, d_out):
    nd, fin = feat_dst.shape
    ns = hsrc.shape[0]
    hid = n_heads * d_out
    tn = _tile(nd, _ROW_TILE)
    ts = _tile(ns, _SRC_TILE)
    kernel = functools.partial(_gat_attn_kernel, n_heads=n_heads, d_out=d_out)
    return pl.pallas_call(
        kernel,
        out_shape=jax.ShapeDtypeStruct((nd, hid), jnp.float32),
        grid=(pl.cdiv(nd, tn), pl.cdiv(ns, ts)),
        in_specs=[
            pl.BlockSpec((tn, fin), lambda i, j: (i, 0)),        # feat_dst tile
            pl.BlockSpec((fin, n_heads), lambda i, j: (0, 0)),   # WR (fused attn_r)
            pl.BlockSpec((n_heads, ts), lambda i, j: (0, j)),    # elT source tile
            pl.BlockSpec((ts, hid), lambda i, j: (j, 0)),        # hsrc source tile
            pl.BlockSpec((tn, ts), lambda i, j: (i, j)),         # adjacency tile (int8)
            pl.BlockSpec((1, hid), lambda i, j: (0, 0)),         # bias
            pl.BlockSpec((tn, hid), lambda i, j: (i, 0)),        # running hetero sum
        ],
        out_specs=pl.BlockSpec((tn, hid), lambda i, j: (i, 0)),
        scratch_shapes=[pltpu.VMEM((n_heads, tn, 1), jnp.float32),     # m (online max)
                        pltpu.VMEM((n_heads, tn, 1), jnp.float32),     # l (online denom)
                        pltpu.VMEM((n_heads, tn, d_out), jnp.float32)],  # acc
        input_output_aliases={6: 0},          # accumulate hetero 'sum' in place
        compiler_params=pltpu.CompilerParams(
            dimension_semantics=("parallel", "arbitrary"),
            vmem_limit_bytes=_VMEM_LIMIT),
    )(feat_dst, wr, elt, hsrc, adj, bias, acc_in)


# ------------------------------- DALayer --------------------------------------
def _da_kernel(prm_ref, x_ref, o_ref, *, ffn_dim):
    # prm layout (SMEM): [wq,bq,wk,bk,wv,bv,wo,bo, b2, w1[0:F], b1[0:F], w2[0:F]]
    x = x_ref[...]                                          # [TN, D] f32
    wq, bq = prm_ref[0], prm_ref[1]
    wk, bk = prm_ref[2], prm_ref[3]
    wv, bv = prm_ref[4], prm_ref[5]
    wo, bo = prm_ref[6], prm_ref[7]
    b2 = prm_ref[8]
    q = x * wq + bq
    k = x * wk + bk
    v = x * wv + bv
    s = q[:, :, None] * k[:, None, :]                       # [TN, D, D], scale = 1/sqrt(1)
    m = jnp.max(s, axis=2, keepdims=True)
    e = jnp.exp(s - m)
    denom = jnp.sum(e, axis=2, keepdims=True)
    a = e * pl.reciprocal(denom, approx=True)               # EUP-friendly, no divides
    attn = jnp.sum(a * v[:, None, :], axis=2)               # [TN, D]
    x = x + (attn * wo + bo)                                # residual (dropout = identity)
    # FFN: unrolled loop over ffn_dim scalars on lane-dense [TN, D] tiles
    ffn = jnp.zeros_like(x)
    for f in range(ffn_dim):
        w1f = prm_ref[9 + f]
        b1f = prm_ref[9 + ffn_dim + f]
        w2f = prm_ref[9 + 2 * ffn_dim + f]
        ffn = ffn + jax.nn.gelu(x * w1f + b1f, approximate=True) * w2f
    o_ref[...] = x + ffn + b2                               # residual


def da_layer(x, prm, *, ffn_dim):
    n, d = x.shape
    tn = _da_row_tile(n, d)                 # sized from [TN,D,D] footprint (v7x-safe)
    kernel = functools.partial(_da_kernel, ffn_dim=ffn_dim)
    return pl.pallas_call(
        kernel,
        out_shape=jax.ShapeDtypeStruct((n, d), jnp.float32),
        grid_spec=pltpu.PrefetchScalarGridSpec(
            num_scalar_prefetch=1,                          # prm -> SMEM
            grid=(pl.cdiv(n, tn),),
            in_specs=[pl.BlockSpec((tn, d), lambda i, prm_ref: (i, 0))],
            out_specs=pl.BlockSpec((tn, d), lambda i, prm_ref: (i, 0))),
        compiler_params=pltpu.CompilerParams(
            dimension_semantics=("parallel",),
            vmem_limit_bytes=_VMEM_LIMIT),
    )(prm, x)


# ------------------------------- final head -----------------------------------
def _final_kernel(h1_ref, h2_ref, w1_ref, w2_ref, b_ref, o_ref):
    h1 = h1_ref[...]
    h2 = h2_ref[...]
    r1 = jax.lax.rsqrt(jnp.maximum(jnp.sum(h1 * h1, axis=1, keepdims=True), 1e-24))
    r2 = jax.lax.rsqrt(jnp.maximum(jnp.sum(h2 * h2, axis=1, keepdims=True), 1e-24))
    # two K=hid matmuls instead of a lane-axis concat + one matmul (no relayout)
    o = jnp.dot(h1 * r1, w1_ref[...], preferred_element_type=jnp.float32)
    o = o + jnp.dot(h2 * r2, w2_ref[...], preferred_element_type=jnp.float32)
    o_ref[...] = o + b_ref[...]


def final_head(h1, h2, w1_pad, w2_pad, b_pad):
    n, hid = h1.shape
    out_pad = w1_pad.shape[1]               # padded to a multiple of 128 (lane-dense)
    tn = _tile(n, _ROW_TILE)
    return pl.pallas_call(
        _final_kernel,
        out_shape=jax.ShapeDtypeStruct((n, out_pad), jnp.float32),
        grid=(pl.cdiv(n, tn),),
        in_specs=[pl.BlockSpec((tn, hid), lambda i: (i, 0)),
                  pl.BlockSpec((tn, hid), lambda i: (i, 0)),
                  pl.BlockSpec((hid, out_pad), lambda i: (0, 0)),
                  pl.BlockSpec((hid, out_pad), lambda i: (0, 0)),
                  pl.BlockSpec((1, out_pad), lambda i: (0, 0))],
        out_specs=pl.BlockSpec((tn, out_pad), lambda i: (i, 0)),
        compiler_params=pltpu.CompilerParams(
            dimension_semantics=("parallel",),
            vmem_limit_bytes=_VMEM_LIMIT),
    )(h1, h2, w1_pad, w2_pad, b_pad)


# ------------------------------- parameters -----------------------------------
def init_params(key, *, in_size, hid, out_size, num_layers, dim_layers,
                n_heads, ffn_dim, ntypes):
    d_out = hid // n_heads
    keys = iter(jax.random.split(key, 256))

    def nrm(shape, scale=0.1):
        return (scale * jax.random.normal(next(keys), shape)).astype(jnp.float32)

    params = {"ntype_emb": nrm((ntypes, in_size), 1.0), "gat": [], "da": []}
    for layer in range(num_layers):
        fin = in_size if layer == 0 else hid
        lyr = {}
        for (_, ename, _) in ETYPES:
            w = nrm((fin, hid), 1.0 / (fin ** 0.5))
            attn_l = nrm((n_heads, d_out), 0.3)
            attn_r = nrm((n_heads, d_out), 0.3)
            # Host-side fused attention projections:
            #   WL[f,h] = sum_d W[f, h*D+d] * attn_l[h,d]   (likewise WR with attn_r)
            w_heads = w.reshape(fin, n_heads, d_out)
            wl = jnp.einsum("fhd,hd->fh", w_heads, attn_l)
            wr = jnp.einsum("fhd,hd->fh", w_heads, attn_r)
            lyr[ename] = dict(
                WC=jnp.concatenate([w, wl], axis=1),   # [fin, hid + H], single matmul
                WR=wr,                                 # [fin, H]
                bias=nrm((1, hid), 0.05),
            )
        params["gat"].append(lyr)
    for _ in range(dim_layers):
        # [wq, bq, wk, bk, wv, bv, wo, bo, b2, w1[F], b1[F], w2[F]]  -> SMEM
        prm = jnp.concatenate([
            nrm((8,), 0.5),
            nrm((1,), 0.1),
            nrm((ffn_dim,), 1.0),
            nrm((ffn_dim,), 0.1),
            nrm((ffn_dim,), 1.0 / (ffn_dim ** 0.5)),
        ])
        params["da"].append(dict(prm=prm))
    # output linear, split into W1/W2 and padded to a lane-dense width
    out_pad = ((out_size + 127) // 128) * 128
    w_lin = nrm((2 * hid, out_size), 1.0 / ((2 * hid) ** 0.5))
    b_lin = nrm((1, out_size), 0.1)
    params["linear_w1"] = (jnp.zeros((hid, out_pad), jnp.float32)
                           .at[:, :out_size].set(w_lin[:hid]))
    params["linear_w2"] = (jnp.zeros((hid, out_pad), jnp.float32)
                           .at[:, :out_size].set(w_lin[hid:]))
    params["linear_b"] = (jnp.zeros((1, out_pad), jnp.float32)
                          .at[:, :out_size].set(b_lin))
    return params


# ------------------------------- forward --------------------------------------
def hetero_gat_forward(params, x, adjs, *, num_layers, dim_layers, n_heads, hid,
                       ffn_dim, out_size):
    d_out = hid // n_heads
    # int8 adjacency: halves the dominant HBM stream; integer edge compare in-kernel
    adjs_i8 = {k: v.astype(jnp.int8) for k, v in adjs.items()}
    # ntype embedding elementwise scaling (x[nty] * ntype_emb[i])
    h = {nt: x[nt] * params["ntype_emb"][i][None, :] for i, nt in enumerate(NTYPES)}
    for layer in range(num_layers):
        h_in = h
        new_h = {}
        for (src, ename, dst) in ETYPES:
            p = params["gat"][layer][ename]
            hsrc, elt = gat_project(h_in[src], p["WC"], hid=hid, n_heads=n_heads)
            acc = new_h.get(dst)
            if acc is None:                       # first etype hitting this dst type
                acc = jnp.zeros((h_in[dst].shape[0], hid), jnp.float32)
            # hetero 'sum' aggregation happens inside the kernel (aliased in/out)
            new_h[dst] = gat_attention(h_in[dst], adjs_i8[ename], p["WR"], elt,
                                       hsrc, p["bias"], acc,
                                       n_heads=n_heads, d_out=d_out)
        h = new_h                                 # already flattened to [N, H*D]
        if layer != num_layers - 1:
            h = {k: jax.nn.relu(v) for k, v in h.items()}   # dropout = identity (eval)
    h1 = h["paper"]                               # [N_paper, hid]
    h_dim = h1                                    # unsqueeze(2) handled inside da_layer
    for layer in range(dim_layers):
        h_dim = da_layer(h_dim, params["da"][layer]["prm"], ffn_dim=ffn_dim)
    out = final_head(h1, h_dim, params["linear_w1"], params["linear_w2"],
                     params["linear_b"])
    return out[:, :out_size]                      # drop lane padding


# --------------------------------- main ----------------------------------------
def make_adj(key, nd, ns, p=0.3):
    a = (jax.random.uniform(key, (nd, ns)) < p).astype(jnp.float32)
    return a.at[:, 0].set(1.0)   # every dst node has >=1 in-edge (DGL requirement)


if __name__ == "__main__":
    in_size, hid, out_size = 16, 32, 8
    num_layers, dim_layers, n_heads, ffn_dim = 2, 2, 4, 16
    nnodes = {"author": 16, "field_of_study": 8, "institution": 8, "paper": 32}

    key = jax.random.PRNGKey(0)
    kp, kx, ka = jax.random.split(key, 3)
    params = init_params(kp, in_size=in_size, hid=hid, out_size=out_size,
                         num_layers=num_layers, dim_layers=dim_layers,
                         n_heads=n_heads, ffn_dim=ffn_dim, ntypes=len(NTYPES))

    xkeys = jax.random.split(kx, len(NTYPES))
    x = {nt: jax.random.normal(xkeys[i], (nnodes[nt], in_size)).astype(jnp.float32)
         for i, nt in enumerate(NTYPES)}

    akeys = jax.random.split(ka, len(ETYPES))
    adjs = {ename: make_adj(akeys[i], nnodes[dst], nnodes[src])
            for i, (src, ename, dst) in enumerate(ETYPES)}

    out = hetero_gat_forward(params, x, adjs, num_layers=num_layers,
                             dim_layers=dim_layers, n_heads=n_heads, hid=hid,
                             ffn_dim=ffn_dim, out_size=out_size)
    out = jax.block_until_ready(out)
    assert out.shape == (nnodes["paper"], out_size), out.shape
    assert bool(jnp.all(jnp.isfinite(out)))
    print("KERNEL_OK")
</pallas_src>

<mosaic_0001>
module attributes {stable_mosaic.version = 11 : i64} {
  func.func @_gat_proj_kernel(%arg0: i32, %arg1: memref<16x16xf32, #tpu.memory_space<vmem>>, %arg2: memref<16x36xf32, #tpu.memory_space<vmem>>, %arg3: memref<16x32xf32, #tpu.memory_space<vmem>>, %arg4: memref<4x16xf32, #tpu.memory_space<vmem>>) attributes {dimension_semantics = [#tpu.dimension_semantics<parallel>], iteration_bounds = array<i64: 1>, scalar_prefetch = 0 : i64, scratch_operands = 0 : i64, tpu.core_type = #tpu.core_type<tc>, window_params = [{transform_indices = @transform_0, window_bounds = array<i64: 16, 16>}, {pipeline_mode = #tpu.pipeline_mode<synchronous>, transform_indices = @transform_1, window_bounds = array<i64: 16, 36>}, {transform_indices = @transform_2, window_bounds = array<i64: 16, 32>}, {transform_indices = @transform_3, window_bounds = array<i64: 4, 16>}]} {
    %c0 = arith.constant 0 : index
    %c0_0 = arith.constant 0 : index
    %0 = vector.load %arg1[%c0, %c0_0] : memref<16x16xf32, #tpu.memory_space<vmem>>, vector<16x16xf32>
    %c0_1 = arith.constant 0 : index
    %c0_2 = arith.constant 0 : index
    %1 = vector.load %arg2[%c0_1, %c0_2] : memref<16x36xf32, #tpu.memory_space<vmem>>, vector<16x36xf32>
    %cst = arith.constant dense<0.000000e+00> : vector<16x36xf32>
    %2 = tpu.matmul %0, %1, %cst {dimension_numbers = #tpu.dot_dimension_numbers<[1], [0], [0], [1], [0, 0, 1, 1], [], []>} : vector<16x16xf32>, vector<16x36xf32>, vector<16x36xf32> -> vector<16x36xf32>
    %3 = vector.extract_strided_slice %2 {offsets = [0, 0], sizes = [16, 32], strides = [1, 1]} : vector<16x36xf32> to vector<16x32xf32>
    %c0_3 = arith.constant 0 : index
    %c0_4 = arith.constant 0 : index
    %4 = vector.load %arg3[%c0_3, %c0_4] : memref<16x32xf32, #tpu.memory_space<vmem>>, vector<16x32xf32>
    tpu.vector_store %arg3[%c0_3, %c0_4], %3 {strides = array<i32>} : memref<16x32xf32, #tpu.memory_space<vmem>>, vector<16x32xf32>,
    %5 = vector.extract_strided_slice %2 {offsets = [0, 32], sizes = [16, 4], strides = [1, 1]} : vector<16x36xf32> to vector<16x4xf32>
    %6 = tpu.transpose %5, [1, 0] : vector<16x4xf32> -> vector<4x16xf32>
    %c0_5 = arith.constant 0 : index
    %c0_6 = arith.constant 0 : index
    %7 = vector.load %arg4[%c0_5, %c0_6] : memref<4x16xf32, #tpu.memory_space<vmem>>, vector<4x16xf32>
    tpu.vector_store %arg4[%c0_5, %c0_6], %6 {strides = array<i32>} : memref<4x16xf32, #tpu.memory_space<vmem>>, vector<4x16xf32>,
    return
  }
  func.func @transform_0(%arg0: i32) -> (i32, i32) {
    %c0_i32 = arith.constant 0 : i32
    %c0_i32_0 = arith.constant 0 : i32
    return %arg0, %c0_i32 : i32, i32
  }
  func.func @transform_1(%arg0: i32) -> (i32, i32) {
    %c0_i32 = arith.constant 0 : i32
    %c0_i32_0 = arith.constant 0 : i32
    %c0_i32_1 = arith.constant 0 : i32
    return %c0_i32, %c0_i32_0 : i32, i32
  }
  func.func @transform_2(%arg0: i32) -> (i32, i32) {
    %c0_i32 = arith.constant 0 : i32
    %c0_i32_0 = arith.constant 0 : i32
    return %arg0, %c0_i32 : i32, i32
  }
  func.func @transform_3(%arg0: i32) -> (i32, i32) {
    %c0_i32 = arith.constant 0 : i32
    %c0_i32_0 = arith.constant 0 : i32
    return %c0_i32, %arg0 : i32, i32
  }
}

</mosaic_0001>

<llo_original>
// kernel: tpu_custom_call.1
$region0: #{tpu_custom_call.1}
  #allocation0 [shape = 'u32[]', space=smem, size = 0x4, offset = 0x4, fixed_abs, tag = 'smem constant byte address 0x4 - core index']
  #allocation1 [shape = 'u32[72,128]{1,0:T(1,128)}', space=vmem, size = 0x9000, scoped, tag = 'internal scratch']
  %s0 = inlined_call_operand.hbm [shape: f32[16,16], index: 0, kind: input, shape index: {}]
  %s1 = inlined_call_operand.hbm [shape: f32[16,36], index: 1, kind: input, shape index: {}]
  %s2 = inlined_call_operand.hbm [shape: f32[16,32], index: 2, kind: output, shape index: {0}]
  %s3 = inlined_call_operand.hbm [shape: f32[4,16], index: 3, kind: output, shape index: {1}]
  %4 = xla_tuple %s2, %s3
  %s5 = sld [smem:[#allocation0]]
  $region34: #{tpu_custom_call.1} parent=0
    _
  %s7 = ssub.s32 1, %s5
  %s8 = scalar_select 0, %s7, %s5
  $region1: #{tpu_custom_call.1} parent=0
    #allocation2 [shape = 'u8[8192]{0}', space=vmem, size = 0x2000, scoped, tag = 'input window, operand 0, single buffered']
    #allocation3 [shape = 's32[1]{0}', space=sflag, size = 0x4, scoped, tag = 'scoped memory for tpu_custom_call.1']
    #allocation4 [shape = 's32[1]{0}', space=sflag, size = 0x4, scoped, tag = 'scoped memory for tpu_custom_call.1']
    #allocation5 [shape = 'u8[8192]{0}', space=vmem, size = 0x2000, scoped, tag = 'input window, operand 1, single buffered']
    #allocation6 [shape = 's32[1]{0}', space=sflag, size = 0x4, scoped, tag = 'scoped memory for tpu_custom_call.1']
    #allocation7 [shape = 'u8[8192]{0}', space=vmem, size = 0x2000, scoped, tag = 'output window, operand 0, single buffered']
    #allocation8 [shape = 'u8[2048]{0}', space=vmem, size = 0x800, scoped, tag = 'output window, operand 1, single buffered']
    #allocation9 [shape = 's32[1]{0}', space=sflag, size = 0x4, scoped, tag = 'scoped memory for tpu_custom_call.1']
    %9 = vsyncpa [#allocation3], 0
    %10 = vsyncpa [#allocation6], 0
    %11 = vsyncpa [#allocation4], 0
    %12 = vsyncpa [#allocation9], 0
    // Predicated region
    $region2: #{tpu_custom_call.1} parent=1 // pred_check
      _
    $region3: #{tpu_custom_call.1} parent=1 // pred_check_branch
      %14 = sbr.rel (0) target = $region5
    $region4: #{tpu_custom_call.1} parent=1 // pred_region
      %16 = vsyncadd [#allocation3], 0
      %s17 = sshll.u32 %s0, 4
      %s18 = int_to_ptr.hbm [resolvable:$true] %s17
      %s19 = sshll.u32 [#allocation2], 4
      %s20 = int_to_ptr.vmem [resolvable:$true] %s19
      %25 = dma.hbm_to_vmem [thread:$0]  %s18, 256, %s20, [#allocation3], 128, 128, 8
    $region5: #{tpu_custom_call.1} parent=1 // pred_fallthru
      _
    // Predicated region
    $region6: #{tpu_custom_call.1} parent=1 // pred_check
      _
    $region7: #{tpu_custom_call.1} parent=1 // pred_check_branch
      %27 = sbr.rel (0) target = $region9
    $region8: #{tpu_custom_call.1} parent=1 // pred_region
      %29 = vsyncadd [#allocation6], 0
      %s30 = sshll.u32 %s1, 4
      %s31 = int_to_ptr.hbm [resolvable:$true] %s30
      %s32 = sshll.u32 [#allocation5], 4
      %s33 = int_to_ptr.vmem [resolvable:$true] %s32
      %38 = dma.hbm_to_vmem [thread:$0]  %s31, 256, %s33, [#allocation6], 128, 128, 8
    $region9: #{tpu_custom_call.1} parent=1 // pred_fallthru
      _
    // Predicated region
    $region10: #{tpu_custom_call.1} parent=1 // pred_check
      _
    $region11: #{tpu_custom_call.1} parent=1 // pred_check_branch
      %40 = sbr.rel (0) target = $region13
    $region12: #{tpu_custom_call.1} parent=1 // pred_region
      %42 = dma.done [#allocation3], 256
    $region13: #{tpu_custom_call.1} parent=1 // pred_fallthru
      _
    // Predicated region
    $region14: #{tpu_custom_call.1} parent=1 // pred_check
      _
    $region15: #{tpu_custom_call.1} parent=1 // pred_check_branch
      %44 = sbr.rel (0) target = $region17
    $region16: #{tpu_custom_call.1} parent=1 // pred_region
      %46 = dma.done [#allocation6], 256
    $region17: #{tpu_custom_call.1} parent=1 // pred_fallthru
      _
    %v47 = vld [vmem:[#allocation2] sm:$0xff]
    %v48 = vld [vmem:[#allocation2 + $0x8] sm:$0xff]
    %v49 = vld [vmem:[#allocation5] sm:$0xff]
    %v50 = vld [vmem:[#allocation5 + $0x8] sm:$0xff]
    %vm51 = vcmask 130048
    %v53 = vsel %vm51, %v47, 0
    %v56 = vsel %vm51, %v48, 0
    %58 = vmatpush.msra.mxu0 0.0
    %59 = vmatpush.msra.mxu0 0.0
    %60 = vmatpush.msra.mxu0 0.0
    %61 = vmatpush.msra.mxu0 0.0
    %62 = vmatpush.msra.mxu0 0.0
    %63 = vmatpush.msra.mxu0 0.0
    %64 = vmatpush.msra.mxu0 0.0
    %65 = vmatpush.msra.mxu0 0.0
    %66 = vmatpush.msra.mxu0 0.0
    %67 = vmatpush.msra.mxu0 0.0
    %68 = vmatpush.msra.mxu0 0.0
    %69 = vmatpush.msra.mxu0 0.0
    %70 = vmatpush.msra.mxu0 0.0
    %71 = vmatpush.msra.mxu0 0.0
    %72 = vmatpush.msra.mxu0 %v50
    %73 = vmatpush.msra.mxu0 %v49
    %74 = vmatmul.f32.gmra.mxu0 %v53
    %v75 = vpop.f32.mrf.mxu0
    %v76 = vadd.f32 0.0, %v75
    %77 = vmatmul.f32.gmra.mxu0 %v56
    %v78 = vpop.f32.mrf.mxu0
    %v79 = vadd.f32 0.0, %v78
    %80 = vdwg.mxu0
    %vm81 = vcmask 261120
    %82 = vst.msk [vmem:[#allocation7] sm:$0xff] %vm81, %v76
    %83 = vst.msk [vmem:[#allocation7 + $0x8] sm:$0xff] %vm81, %v79
    %86 = vrot.lane.b32.xlu0 %v76, 96
    %v87 = vpop.permute.xlu0 %86
    %88 = vrot.lane.b32.xlu0 %v79, 96
    %v89 = vpop.permute.xlu0 %88
    %92 = vxpose.xlu0.b32.start [1/16] %v87, 128
    %93 = vxpose.xlu0.b32.cont [2/16] %v89, 128
    %94 = vxpose.xlu0.b32.cont [3/16] 0.0, 128
    %95 = vxpose.xlu0.b32.cont [4/16] 0.0, 128
    %96 = vxpose.xlu0.b32.cont [5/16] 0.0, 128
    %97 = vxpose.xlu0.b32.cont [6/16] 0.0, 128
    %98 = vxpose.xlu0.b32.cont [7/16] 0.0, 128
    %99 = vxpose.xlu0.b32.cont [8/16] 0.0, 128
    %100 = vxpose.xlu0.b32.cont [9/16] 0.0, 128
    %101 = vxpose.xlu0.b32.cont [10/16] 0.0, 128
    %102 = vxpose.xlu0.b32.cont [11/16] 0.0, 128
    %103 = vxpose.xlu0.b32.cont [12/16] 0.0, 128
    %104 = vxpose.xlu0.b32.cont [13/16] 0.0, 128
    %105 = vxpose.xlu0.b32.cont [14/16] 0.0, 128
    %106 = vxpose.xlu0.b32.cont [15/16] 0.0, 128
    %107 = vxpose.xlu0.b32.end [16/16] 0.0, 128
    %v108 = vpop.trf.xlu0
    %v109 = vpop.trf.xlu0
    %v110 = vpop.trf.xlu0
    %v111 = vpop.trf.xlu0
    %v112 = vpop.trf.xlu0
    %v113 = vpop.trf.xlu0
    %v114 = vpop.trf.xlu0
    %v115 = vpop.trf.xlu0
    %v116 = vpop.trf.xlu0
    %v117 = vpop.trf.xlu0
    %v118 = vpop.trf.xlu0
    %v119 = vpop.trf.xlu0
    %v120 = vpop.trf.xlu0
    %v121 = vpop.trf.xlu0
    %v122 = vpop.trf.xlu0
    %v123 = vpop.trf.xlu0
    %vm124 = vcmask 125952
    %125 = vst.msk [vmem:[#allocation8] sm:$0xf] %vm124, %v108
    // Predicated region
    $region18: #{tpu_custom_call.1} parent=1 // pred_check
      _
    $region19: #{tpu_custom_call.1} parent=1 // pred_check_branch
      %127 = sbr.rel (0) target = $region21
    $region20: #{tpu_custom_call.1} parent=1 // pred_region
      %129 = vsyncadd [#allocation4], 0
      %s130 = sshll.u32 [#allocation7], 4
      %s131 = int_to_ptr.vmem [resolvable:$true] %s130
      %s132 = sshll.u32 %s2, 4
      %s133 = int_to_ptr.hbm [resolvable:$true] %s132
      %138 = dma.vmem_to_hbm [thread:$0]  %s131, 256, %s133, [#allocation4], 128, 128, 8
    $region21: #{tpu_custom_call.1} parent=1 // pred_fallthru
      _
    // Predicated region
    $region22: #{tpu_custom_call.1} parent=1 // pred_check
      _
    $region23: #{tpu_custom_call.1} parent=1 // pred_check_branch
      %140 = sbr.rel (0) target = $region25
    $region24: #{tpu_custom_call.1} parent=1 // pred_region
      %142 = vsyncadd [#allocation9], 0
      %s144 = sshll.u32 [#allocation8], 4
      %s145 = int_to_ptr.vmem [resolvable:$true] %s144
      %s146 = sshll.u32 %s3, 4
      %s147 = int_to_ptr.hbm [resolvable:$true] %s146
      %149 = dma.vmem_to_hbm [thread:$0]  %s145, 64, %s147, [#allocation9]
    $region25: #{tpu_custom_call.1} parent=1 // pred_fallthru
      _
    // Predicated region
    $region26: #{tpu_custom_call.1} parent=1 // pred_check
      _
    $region27: #{tpu_custom_call.1} parent=1 // pred_check_branch
      %151 = sbr.rel (0) target = $region29
    $region28: #{tpu_custom_call.1} parent=1 // pred_region
      %153 = dma.done [#allocation4], 256
    $region29: #{tpu_custom_call.1} parent=1 // pred_fallthru
      _
    // Predicated region
    $region30: #{tpu_custom_call.1} parent=1 // pred_check
      _
    $region31: #{tpu_custom_call.1} parent=1 // pred_check_branch
      %155 = sbr.rel (0) target = $region33
    $region32: #{tpu_custom_call.1} parent=1 // pred_region
      %157 = dma.done [#allocation9], 64
    $region33: #{tpu_custom_call.1} parent=1 // pred_fallthru
      _
    %158 = vsyncpa [#allocation3], 1
    %159 = vsyncpa [#allocation6], 1
    %160 = vsyncpa [#allocation4], 1
    %161 = vsyncpa [#allocation9], 1

</llo_original>
